<compile_context>
chip_gen: v7x
topology: tpu7x:2x2x1
jax: 0.10.0
libtpu: 0.0.40
codegen_flags: <defaults>
</compile_context>

<pallas_src>
import jax
import jax.numpy as jnp
from jax.experimental import pallas as pl
from jax.experimental.pallas import tpu as pltpu

_LANES = 128


def _reg_kernel(a_ref, b_ref, c_ref, o_ref):
    """o_ref: (8, 8, 128) f32 accumulator block, resident across the
    'arbitrary' grid axis.  Rows 0..7 hold per-(sublane,lane) partial sums of
    a, b, c, a*a, b*b, c*c, a*c, b*c respectively."""

    @pl.when(pl.program_id(1) == 0)
    def _init():
        o_ref[...] = jnp.zeros_like(o_ref)

    a = a_ref[...].astype(jnp.float32)
    b = b_ref[...].astype(jnp.float32)
    c = c_ref[...].astype(jnp.float32)

    def lane_sums(x):
        # (tile, 128) -> (tile//8, 8, 128); summing over the leading axis is
        # pure vreg-wise VPU addition (no XLU cross-lane work in the hot loop).
        return jnp.sum(x.reshape(-1, 8, _LANES), axis=0)

    o_ref[0] += lane_sums(a)
    o_ref[1] += lane_sums(b)
    o_ref[2] += lane_sums(c)
    o_ref[3] += lane_sums(a * a)
    o_ref[4] += lane_sums(b * b)
    o_ref[5] += lane_sums(c * c)
    o_ref[6] += lane_sums(a * c)
    o_ref[7] += lane_sums(b * c)


def _round_up(x, m):
    return (x + m - 1) // m * m


def _cdiv(x, m):
    return (x + m - 1) // m


def reg_pallas(a, b, c, *, num_splits=2, max_tile_rows=1024):
    """REG forward: corr2(a, c) + corr2(b, c).  a, b, c: same-shape arrays
    (e.g. NCHW).  Returns an f32 scalar."""
    assert a.shape == b.shape == c.shape, "inputs must have identical shapes"
    total = a.size
    itemsize = jnp.dtype(a.dtype).itemsize
    # Minimum sublane granularity for the input dtype (f32: 8, bf16: 16, i8: 32).
    min_rows = max(8, 32 // max(1, itemsize))

    rows = _cdiv(total, _LANES)
    rows_per_split = _cdiv(rows, num_splits)
    tile = min(max_tile_rows, _round_up(rows_per_split, min_rows))
    tile = _round_up(tile, min_rows)
    steps = _cdiv(rows, num_splits * tile)
    rows_padded = num_splits * tile * steps
    padded_total = rows_padded * _LANES

    def to_slab(x):
        flat = x.reshape(-1)
        if padded_total != total:
            flat = jnp.pad(flat, (0, padded_total - total))
        return flat.reshape(rows_padded, _LANES)

    a2, b2, c2 = to_slab(a), to_slab(b), to_slab(c)

    in_spec = pl.BlockSpec((tile, _LANES), lambda p, i: (p * steps + i, 0))

    partials = pl.pallas_call(
        _reg_kernel,
        out_shape=jax.ShapeDtypeStruct((num_splits * 8, 8, _LANES), jnp.float32),
        grid_spec=pltpu.PrefetchScalarGridSpec(
            num_scalar_prefetch=0,
            grid=(num_splits, steps),
            in_specs=[in_spec, in_spec, in_spec],
            out_specs=pl.BlockSpec((8, 8, _LANES), lambda p, i: (p, 0, 0)),
        ),
        compiler_params=pltpu.CompilerParams(
            dimension_semantics=("parallel", "arbitrary")),
    )(a2, b2, c2)

    # Tiny epilogue: combine per-core / per-lane partials and apply corr2.
    sums = partials.reshape(num_splits, 8, 8, _LANES).sum(axis=(0, 2, 3))
    n = jnp.float32(total)
    sa, sb, sc = sums[0], sums[1], sums[2]
    saa, sbb, scc = sums[3], sums[4], sums[5]
    sac, sbc = sums[6], sums[7]

    cov_ac = sac - sa * sc / n
    cov_bc = sbc - sb * sc / n
    var_a = saa - sa * sa / n
    var_b = sbb - sb * sb / n
    var_c = scc - sc * sc / n

    return cov_ac / jnp.sqrt(var_a * var_c) + cov_bc / jnp.sqrt(var_b * var_c)


def reg_reference(a, b, c):
    def corr2(x, y):
        xc = x - jnp.mean(x)
        yc = y - jnp.mean(y)
        return jnp.sum(xc * yc) / jnp.sqrt(jnp.sum(xc * xc) * jnp.sum(yc * yc))
    return corr2(a, c) + corr2(b, c)


if __name__ == "__main__":
    key = jax.random.PRNGKey(0)
    ka, kb, kc = jax.random.split(key, 3)
    shape = (2, 4, 16, 16)  # NCHW, total = 2048 elements
    a = jax.random.normal(ka, shape, dtype=jnp.float32)
    b = jax.random.normal(kb, shape, dtype=jnp.float32)
    c = jax.random.normal(kc, shape, dtype=jnp.float32)

    out = jax.jit(reg_pallas)(a, b, c)
    out = jax.block_until_ready(out)

    ref = reg_reference(a, b, c)
    assert jnp.allclose(out, ref, atol=2e-5, rtol=1e-3), (out, ref)

    print("KERNEL_OK")
</pallas_src>

<mosaic_0001>
module attributes {stable_mosaic.version = 11 : i64} {
  func.func @_reg_kernel(%arg0: i32, %arg1: i32, %arg2: memref<8x128xf32, #tpu.memory_space<vmem>>, %arg3: memref<8x128xf32, #tpu.memory_space<vmem>>, %arg4: memref<8x128xf32, #tpu.memory_space<vmem>>, %arg5: memref<8x8x128xf32, #tpu.memory_space<vmem>>) attributes {dimension_semantics = [#tpu.dimension_semantics<parallel>, #tpu.dimension_semantics<arbitrary>], iteration_bounds = array<i64: 2, 1>, scalar_prefetch = 0 : i64, scratch_operands = 0 : i64, tpu.core_type = #tpu.core_type<tc>, window_params = [{transform_indices = @transform_0, window_bounds = array<i64: 8, 128>}, {transform_indices = @transform_1, window_bounds = array<i64: 8, 128>}, {transform_indices = @transform_2, window_bounds = array<i64: 8, 128>}, {transform_indices = @transform_3, window_bounds = array<i64: 8, 8, 128>}]} {
    %c0_i32 = arith.constant 0 : i32
    %0 = arith.cmpi eq, %arg1, %c0_i32 : i32
    %1 = arith.extui %0 : i1 to i32
    %c0_i32_0 = arith.constant 0 : i32
    %2 = arith.cmpi ne, %1, %c0_i32_0 : i32
    scf.if %2 {
      %cst_54 = arith.constant 0.000000e+00 : f32
      %75 = vector.broadcast %cst_54 : f32 to vector<8x8x128xf32>
      %c0_55 = arith.constant 0 : index
      %c0_56 = arith.constant 0 : index
      %c0_57 = arith.constant 0 : index
      %76 = vector.load %arg5[%c0_55, %c0_56, %c0_57] : memref<8x8x128xf32, #tpu.memory_space<vmem>>, vector<8x8x128xf32>
      tpu.vector_store %arg5[%c0_55, %c0_56, %c0_57], %75 {strides = array<i32>} : memref<8x8x128xf32, #tpu.memory_space<vmem>>, vector<8x8x128xf32>,
    } else {
    }
    %c0 = arith.constant 0 : index
    %c0_1 = arith.constant 0 : index
    %3 = vector.load %arg2[%c0, %c0_1] : memref<8x128xf32, #tpu.memory_space<vmem>>, vector<8x128xf32>
    %c0_2 = arith.constant 0 : index
    %c0_3 = arith.constant 0 : index
    %4 = vector.load %arg3[%c0_2, %c0_3] : memref<8x128xf32, #tpu.memory_space<vmem>>, vector<8x128xf32>
    %c0_4 = arith.constant 0 : index
    %c0_5 = arith.constant 0 : index
    %5 = vector.load %arg4[%c0_4, %c0_5] : memref<8x128xf32, #tpu.memory_space<vmem>>, vector<8x128xf32>
    %c0_6 = arith.constant 0 : index
    %c0_7 = arith.constant 0 : index
    %c0_8 = arith.constant 0 : index
    %6 = vector.load %arg5[%c0_6, %c0_7, %c0_8] : memref<8x8x128xf32, #tpu.memory_space<vmem>>, vector<1x8x128xf32>
    %7 = vector.shape_cast %6 : vector<1x8x128xf32> to vector<8x128xf32>
    %8 = vector.shape_cast %3 : vector<8x128xf32> to vector<1x8x128xf32>
    %cst = arith.constant dense<0.000000e+00> : vector<8x128xf32>
    %9 = vector.multi_reduction <add>, %8, %cst [0] : vector<1x8x128xf32> to vector<8x128xf32>
    %10 = arith.addf %7, %9 : vector<8x128xf32>
    %c0_9 = arith.constant 0 : index
    %c0_10 = arith.constant 0 : index
    %c0_11 = arith.constant 0 : index
    %11 = vector.load %arg5[%c0_9, %c0_10, %c0_11] : memref<8x8x128xf32, #tpu.memory_space<vmem>>, vector<1x8x128xf32>
    %12 = vector.shape_cast %11 : vector<1x8x128xf32> to vector<8x128xf32>
    %13 = vector.shape_cast %10 : vector<8x128xf32> to vector<1x8x128xf32>
    tpu.vector_store %arg5[%c0_9, %c0_10, %c0_11], %13 {strides = array<i32>} : memref<8x8x128xf32, #tpu.memory_space<vmem>>, vector<1x8x128xf32>,
    %c1 = arith.constant 1 : index
    %c0_12 = arith.constant 0 : index
    %c0_13 = arith.constant 0 : index
    %14 = vector.load %arg5[%c1, %c0_12, %c0_13] : memref<8x8x128xf32, #tpu.memory_space<vmem>>, vector<1x8x128xf32>
    %15 = vector.shape_cast %14 : vector<1x8x128xf32> to vector<8x128xf32>
    %16 = vector.shape_cast %4 : vector<8x128xf32> to vector<1x8x128xf32>
    %cst_14 = arith.constant dense<0.000000e+00> : vector<8x128xf32>
    %17 = vector.multi_reduction <add>, %16, %cst_14 [0] : vector<1x8x128xf32> to vector<8x128xf32>
    %18 = arith.addf %15, %17 : vector<8x128xf32>
    %c1_15 = arith.constant 1 : index
    %c0_16 = arith.constant 0 : index
    %c0_17 = arith.constant 0 : index
    %19 = vector.load %arg5[%c1_15, %c0_16, %c0_17] : memref<8x8x128xf32, #tpu.memory_space<vmem>>, vector<1x8x128xf32>
    %20 = vector.shape_cast %19 : vector<1x8x128xf32> to vector<8x128xf32>
    %21 = vector.shape_cast %18 : vector<8x128xf32> to vector<1x8x128xf32>
    tpu.vector_store %arg5[%c1_15, %c0_16, %c0_17], %21 {strides = array<i32>} : memref<8x8x128xf32, #tpu.memory_space<vmem>>, vector<1x8x128xf32>,
    %c2 = arith.constant 2 : index
    %c0_18 = arith.constant 0 : index
    %c0_19 = arith.constant 0 : index
    %22 = vector.load %arg5[%c2, %c0_18, %c0_19] : memref<8x8x128xf32, #tpu.memory_space<vmem>>, vector<1x8x128xf32>
    %23 = vector.shape_cast %22 : vector<1x8x128xf32> to vector<8x128xf32>
    %24 = vector.shape_cast %5 : vector<8x128xf32> to vector<1x8x128xf32>
    %cst_20 = arith.constant dense<0.000000e+00> : vector<8x128xf32>
    %25 = vector.multi_reduction <add>, %24, %cst_20 [0] : vector<1x8x128xf32> to vector<8x128xf32>
    %26 = arith.addf %23, %25 : vector<8x128xf32>
    %c2_21 = arith.constant 2 : index
    %c0_22 = arith.constant 0 : index
    %c0_23 = arith.constant 0 : index
    %27 = vector.load %arg5[%c2_21, %c0_22, %c0_23] : memref<8x8x128xf32, #tpu.memory_space<vmem>>, vector<1x8x128xf32>
    %28 = vector.shape_cast %27 : vector<1x8x128xf32> to vector<8x128xf32>
    %29 = vector.shape_cast %26 : vector<8x128xf32> to vector<1x8x128xf32>
    tpu.vector_store %arg5[%c2_21, %c0_22, %c0_23], %29 {strides = array<i32>} : memref<8x8x128xf32, #tpu.memory_space<vmem>>, vector<1x8x128xf32>,
    %c3 = arith.constant 3 : index
    %c0_24 = arith.constant 0 : index
    %c0_25 = arith.constant 0 : index
    %30 = vector.load %arg5[%c3, %c0_24, %c0_25] : memref<8x8x128xf32, #tpu.memory_space<vmem>>, vector<1x8x128xf32>
    %31 = vector.shape_cast %30 : vector<1x8x128xf32> to vector<8x128xf32>
    %32 = arith.mulf %3, %3 : vector<8x128xf32>
    %33 = vector.shape_cast %32 : vector<8x128xf32> to vector<1x8x128xf32>
    %cst_26 = arith.constant dense<0.000000e+00> : vector<8x128xf32>
    %34 = vector.multi_reduction <add>, %33, %cst_26 [0] : vector<1x8x128xf32> to vector<8x128xf32>
    %35 = arith.addf %31, %34 : vector<8x128xf32>
    %c3_27 = arith.constant 3 : index
    %c0_28 = arith.constant 0 : index
    %c0_29 = arith.constant 0 : index
    %36 = vector.load %arg5[%c3_27, %c0_28, %c0_29] : memref<8x8x128xf32, #tpu.memory_space<vmem>>, vector<1x8x128xf32>
    %37 = vector.shape_cast %36 : vector<1x8x128xf32> to vector<8x128xf32>
    %38 = vector.shape_cast %35 : vector<8x128xf32> to vector<1x8x128xf32>
    tpu.vector_store %arg5[%c3_27, %c0_28, %c0_29], %38 {strides = array<i32>} : memref<8x8x128xf32, #tpu.memory_space<vmem>>, vector<1x8x128xf32>,
    %c4 = arith.constant 4 : index
    %c0_30 = arith.constant 0 : index
    %c0_31 = arith.constant 0 : index
    %39 = vector.load %arg5[%c4, %c0_30, %c0_31] : memref<8x8x128xf32, #tpu.memory_space<vmem>>, vector<1x8x128xf32>
    %40 = vector.shape_cast %39 : vector<1x8x128xf32> to vector<8x128xf32>
    %41 = arith.mulf %4, %4 : vector<8x128xf32>
    %42 = vector.shape_cast %41 : vector<8x128xf32> to vector<1x8x128xf32>
    %cst_32 = arith.constant dense<0.000000e+00> : vector<8x128xf32>
    %43 = vector.multi_reduction <add>, %42, %cst_32 [0] : vector<1x8x128xf32> to vector<8x128xf32>
    %44 = arith.addf %40, %43 : vector<8x128xf32>
    %c4_33 = arith.constant 4 : index
    %c0_34 = arith.constant 0 : index
    %c0_35 = arith.constant 0 : index
    %45 = vector.load %arg5[%c4_33, %c0_34, %c0_35] : memref<8x8x128xf32, #tpu.memory_space<vmem>>, vector<1x8x128xf32>
    %46 = vector.shape_cast %45 : vector<1x8x128xf32> to vector<8x128xf32>
    %47 = vector.shape_cast %44 : vector<8x128xf32> to vector<1x8x128xf32>
    tpu.vector_store %arg5[%c4_33, %c0_34, %c0_35], %47 {strides = array<i32>} : memref<8x8x128xf32, #tpu.memory_space<vmem>>, vector<1x8x128xf32>,
    %c5 = arith.constant 5 : index
    %c0_36 = arith.constant 0 : index
    %c0_37 = arith.constant 0 : index
    %48 = vector.load %arg5[%c5, %c0_36, %c0_37] : memref<8x8x128xf32, #tpu.memory_space<vmem>>, vector<1x8x128xf32>
    %49 = vector.shape_cast %48 : vector<1x8x128xf32> to vector<8x128xf32>
    %50 = arith.mulf %5, %5 : vector<8x128xf32>
    %51 = vector.shape_cast %50 : vector<8x128xf32> to vector<1x8x128xf32>
    %cst_38 = arith.constant dense<0.000000e+00> : vector<8x128xf32>
    %52 = vector.multi_reduction <add>, %51, %cst_38 [0] : vector<1x8x128xf32> to vector<8x128xf32>
    %53 = arith.addf %49, %52 : vector<8x128xf32>
    %c5_39 = arith.constant 5 : index
    %c0_40 = arith.constant 0 : index
    %c0_41 = arith.constant 0 : index
    %54 = vector.load %arg5[%c5_39, %c0_40, %c0_41] : memref<8x8x128xf32, #tpu.memory_space<vmem>>, vector<1x8x128xf32>
    %55 = vector.shape_cast %54 : vector<1x8x128xf32> to vector<8x128xf32>
    %56 = vector.shape_cast %53 : vector<8x128xf32> to vector<1x8x128xf32>
    tpu.vector_store %arg5[%c5_39, %c0_40, %c0_41], %56 {strides = array<i32>} : memref<8x8x128xf32, #tpu.memory_space<vmem>>, vector<1x8x128xf32>,
    %c6 = arith.constant 6 : index
    %c0_42 = arith.constant 0 : index
    %c0_43 = arith.constant 0 : index
    %57 = vector.load %arg5[%c6, %c0_42, %c0_43] : memref<8x8x128xf32, #tpu.memory_space<vmem>>, vector<1x8x128xf32>
    %58 = vector.shape_cast %57 : vector<1x8x128xf32> to vector<8x128xf32>
    %59 = arith.mulf %3, %5 : vector<8x128xf32>
    %60 = vector.shape_cast %59 : vector<8x128xf32> to vector<1x8x128xf32>
    %cst_44 = arith.constant dense<0.000000e+00> : vector<8x128xf32>
    %61 = vector.multi_reduction <add>, %60, %cst_44 [0] : vector<1x8x128xf32> to vector<8x128xf32>
    %62 = arith.addf %58, %61 : vector<8x128xf32>
    %c6_45 = arith.constant 6 : index
    %c0_46 = arith.constant 0 : index
    %c0_47 = arith.constant 0 : index
    %63 = vector.load %arg5[%c6_45, %c0_46, %c0_47] : memref<8x8x128xf32, #tpu.memory_space<vmem>>, vector<1x8x128xf32>
    %64 = vector.shape_cast %63 : vector<1x8x128xf32> to vector<8x128xf32>
    %65 = vector.shape_cast %62 : vector<8x128xf32> to vector<1x8x128xf32>
    tpu.vector_store %arg5[%c6_45, %c0_46, %c0_47], %65 {strides = array<i32>} : memref<8x8x128xf32, #tpu.memory_space<vmem>>, vector<1x8x128xf32>,
    %c7 = arith.constant 7 : index
    %c0_48 = arith.constant 0 : index
    %c0_49 = arith.constant 0 : index
    %66 = vector.load %arg5[%c7, %c0_48, %c0_49] : memref<8x8x128xf32, #tpu.memory_space<vmem>>, vector<1x8x128xf32>
    %67 = vector.shape_cast %66 : vector<1x8x128xf32> to vector<8x128xf32>
    %68 = arith.mulf %4, %5 : vector<8x128xf32>
    %69 = vector.shape_cast %68 : vector<8x128xf32> to vector<1x8x128xf32>
    %cst_50 = arith.constant dense<0.000000e+00> : vector<8x128xf32>
    %70 = vector.multi_reduction <add>, %69, %cst_50 [0] : vector<1x8x128xf32> to vector<8x128xf32>
    %71 = arith.addf %67, %70 : vector<8x128xf32>
    %c7_51 = arith.constant 7 : index
    %c0_52 = arith.constant 0 : index
    %c0_53 = arith.constant 0 : index
    %72 = vector.load %arg5[%c7_51, %c0_52, %c0_53] : memref<8x8x128xf32, #tpu.memory_space<vmem>>, vector<1x8x128xf32>
    %73 = vector.shape_cast %72 : vector<1x8x128xf32> to vector<8x128xf32>
    %74 = vector.shape_cast %71 : vector<8x128xf32> to vector<1x8x128xf32>
    tpu.vector_store %arg5[%c7_51, %c0_52, %c0_53], %74 {strides = array<i32>} : memref<8x8x128xf32, #tpu.memory_space<vmem>>, vector<1x8x128xf32>,
    return
  }
  func.func @transform_0(%arg0: i32, %arg1: i32) -> (i32, i32) {
    %c1_i32 = arith.constant 1 : i32
    %0 = arith.muli %arg0, %c1_i32 : i32
    %1 = arith.addi %0, %arg1 : i32
    %c0_i32 = arith.constant 0 : i32
    %c0_i32_0 = arith.constant 0 : i32
    return %1, %c0_i32 : i32, i32
  }
  func.func @transform_1(%arg0: i32, %arg1: i32) -> (i32, i32) {
    %c1_i32 = arith.constant 1 : i32
    %0 = arith.muli %arg0, %c1_i32 : i32
    %1 = arith.addi %0, %arg1 : i32
    %c0_i32 = arith.constant 0 : i32
    %c0_i32_0 = arith.constant 0 : i32
    return %1, %c0_i32 : i32, i32
  }
  func.func @transform_2(%arg0: i32, %arg1: i32) -> (i32, i32) {
    %c1_i32 = arith.constant 1 : i32
    %0 = arith.muli %arg0, %c1_i32 : i32
    %1 = arith.addi %0, %arg1 : i32
    %c0_i32 = arith.constant 0 : i32
    %c0_i32_0 = arith.constant 0 : i32
    return %1, %c0_i32 : i32, i32
  }
  func.func @transform_3(%arg0: i32, %arg1: i32) -> (i32, i32, i32) {
    %c0_i32 = arith.constant 0 : i32
    %c0_i32_0 = arith.constant 0 : i32
    %c0_i32_1 = arith.constant 0 : i32
    return %arg0, %c0_i32, %c0_i32_0 : i32, i32, i32
  }
}

</mosaic_0001>

<llo_original>
// kernel: reg_pallas.1
$region0: #{reg_pallas.1}
  #allocation0 [shape = 'u32[]', space=smem, size = 0x4, offset = 0x4, fixed_abs, tag = 'smem constant byte address 0x4 - core index']
  #allocation1 [shape = 'u32[144,128]{1,0:T(1,128)}', space=vmem, size = 0x12000, scoped, tag = 'internal scratch']
  %s0 = inlined_call_operand.vmem [shape: f32[16,128], index: 0, kind: input, shape index: {}]
  %s1 = inlined_call_operand.vmem [shape: f32[16,128], index: 1, kind: input, shape index: {}]
  %s2 = inlined_call_operand.vmem [shape: f32[16,128], index: 2, kind: input, shape index: {}]
  %s3 = inlined_call_operand.vmem [shape: f32[16,8,128], index: 3, kind: output, shape index: {}]
  %s4 = sld [smem:[#allocation0]]
  $region49: #{reg_pallas.1} parent=0
    _
  %s6 = ssub.s32 1, %s4
  %s7 = scalar_select 0, %s6, %s4
  loop: start=0, step=1, limit=4
  $region2: #{reg_pallas.1} parent=0 // loop_pre_header
    _
  $region3: #{reg_pallas.1} parent=0 // loop_header
    %s9 = sphi 0, %s13
    %p10 = scmp.ge.s32.totalorder %s9, 4
    %s16 = sphi 0, %s28
    %s17 = sphi 0, %s24
    %s18 = sphi 0, %s16
    %s19 = sphi 0, %s17
    %s20 = sphi 0, %s18
    %s21 = sphi 0, %s19
    %s33 = sphi 0, %s35
    %s36 = sphi 0, %s33
    %s37 = sphi 0, %s36
    %s53 = sphi 0, %s37
    %s61 = sphi 0, %s63
    %s64 = sphi 0, %s61
    %s65 = sphi 0, %s64
    %s81 = sphi 0, %s65
    %s89 = sphi 0, %s91
    %s92 = sphi 0, %s89
    %s93 = sphi 0, %s92
    %s109 = sphi 0, %s93
    %s115 = sphi 0, %s117
    %s118 = sphi 0, %s115
    %s119 = sphi 0, %s118
    %s135 = sphi 0, %s119
  $region4: #{reg_pallas.1} parent=0 // loop_header_branch
    %12 = sbr.rel (%p10) target = $region8
  $region5: #{reg_pallas.1} parent=0 // loop_body
    %s14 = ssub.s32 %s9, 1
    %s15 = ssub.s32 %s9, 2
    %s22 = sadd.s32 1, %s17
    %p23 = scmp.ge.s32.totalorder %s22, 1
    %s24 = scalar_select %p23, 0, %s22
    %s25 = sadd.s32 1, %s16
    %s26 = scalar_select %p23, %s25, %s16
    %p27 = scmp.ge.s32.totalorder %s26, 2
    %s28 = scalar_select %p27, 0, %s26
    %s29 = sadd.s32 %s16, %s17
    %s30 = sadd.s32 %s28, %s24
    %s31 = ssub.s32 %s29, %s30
    %p32 = scmp.eq.s32.totalorder %s31, 0
    %s34 = sadd.s32 %s33, 1
    %s35 = scalar_select %p32, %s33, %s34
    %p38 = pneg %p32
    %p39 = scmp.eq.s32.totalorder %s9, 1
    %p40 = por %p38, %p39
    %p41 = scmp.ne.s32.totalorder %s33, %s36
    %p42 = scmp.eq.s32.totalorder %s9, 0
    %p43 = por %p41, %p42
    %p44 = scmp.ne.s32.totalorder %s33, %s36
    %p45 = scmp.eq.s32.totalorder %s14, 1
    %p46 = por %p44, %p45
    %p47 = scmp.ne.s32.totalorder %s36, %s37
    %p48 = scmp.eq.s32.totalorder %s14, 0
    %p49 = por %p47, %p48
    %p50 = scmp.ne.s32.totalorder %s36, %s37
    %p51 = scmp.eq.s32.totalorder %s15, 1
    %p52 = por %p50, %p51
    %p54 = scmp.ne.s32.totalorder %s37, %s53
    %p55 = scmp.eq.s32.totalorder %s15, 0
    %p56 = por %p54, %p55
    %s57 = sadd.s32 %s16, %s17
    %s58 = sadd.s32 %s28, %s24
    %s59 = ssub.s32 %s57, %s58
    %p60 = scmp.eq.s32.totalorder %s59, 0
    %s62 = sadd.s32 %s61, 1
    %s63 = scalar_select %p60, %s61, %s62
    %p66 = pneg %p60
    %p67 = scmp.eq.s32.totalorder %s9, 1
    %p68 = por %p66, %p67
    %p69 = scmp.ne.s32.totalorder %s61, %s64
    %p70 = scmp.eq.s32.totalorder %s9, 0
    %p71 = por %p69, %p70
    %p72 = scmp.ne.s32.totalorder %s61, %s64
    %p73 = scmp.eq.s32.totalorder %s14, 1
    %p74 = por %p72, %p73
    %p75 = scmp.ne.s32.totalorder %s64, %s65
    %p76 = scmp.eq.s32.totalorder %s14, 0
    %p77 = por %p75, %p76
    %p78 = scmp.ne.s32.totalorder %s64, %s65
    %p79 = scmp.eq.s32.totalorder %s15, 1
    %p80 = por %p78, %p79
    %p82 = scmp.ne.s32.totalorder %s65, %s81
    %p83 = scmp.eq.s32.totalorder %s15, 0
    %p84 = por %p82, %p83
    %s85 = sadd.s32 %s16, %s17
    %s86 = sadd.s32 %s28, %s24
    %s87 = ssub.s32 %s85, %s86
    %p88 = scmp.eq.s32.totalorder %s87, 0
    %s90 = sadd.s32 %s89, 1
    %s91 = scalar_select %p88, %s89, %s90
    %p94 = pneg %p88
    %p95 = scmp.eq.s32.totalorder %s9, 1
    %p96 = por %p94, %p95
    %p97 = scmp.ne.s32.totalorder %s89, %s92
    %p98 = scmp.eq.s32.totalorder %s9, 0
    %p99 = por %p97, %p98
    %p100 = scmp.ne.s32.totalorder %s89, %s92
    %p101 = scmp.eq.s32.totalorder %s14, 1
    %p102 = por %p100, %p101
    %p103 = scmp.ne.s32.totalorder %s92, %s93
    %p104 = scmp.eq.s32.totalorder %s14, 0
    %p105 = por %p103, %p104
    %p106 = scmp.ne.s32.totalorder %s92, %s93
    %p107 = scmp.eq.s32.totalorder %s15, 1
    %p108 = por %p106, %p107
    %p110 = scmp.ne.s32.totalorder %s93, %s109
    %p111 = scmp.eq.s32.totalorder %s15, 0
    %p112 = por %p110, %p111
    %s113 = ssub.s32 %s16, %s28
    %p114 = scmp.eq.s32.totalorder %s113, 0
    %s116 = sadd.s32 %s115, 1
    %s117 = scalar_select %p114, %s115, %s116
    %p120 = pneg %p114
    %p121 = scmp.eq.s32.totalorder %s9, 1
    %p122 = por %p120, %p121
    %p123 = scmp.ne.s32.totalorder %s115, %s118
    %p124 = scmp.eq.s32.totalorder %s9, 0
    %p125 = por %p123, %p124
    %p126 = scmp.ne.s32.totalorder %s115, %s118
    %p127 = scmp.eq.s32.totalorder %s14, 1
    %p128 = por %p126, %p127
    %p129 = scmp.ne.s32.totalorder %s118, %s119
    %p130 = scmp.eq.s32.totalorder %s14, 0
    %p131 = por %p129, %p130
    %p132 = scmp.ne.s32.totalorder %s118, %s119
    %p133 = scmp.eq.s32.totalorder %s15, 1
    %p134 = por %p132, %p133
    %p136 = scmp.ne.s32.totalorder %s119, %s135
    %p137 = scmp.eq.s32.totalorder %s15, 0
    %p138 = por %p136, %p137
    %p139 = scmp.le.s32.totalorder 1, %s9
    %p140 = scmp.lt.s32.totalorder %s9, 3
    %p141 = pnand %p139, %p140
    %p142 = pneg %p141
    // Predicated region
    $region9: #{reg_pallas.1} parent=5 // pred_check
      _
    $region10: #{reg_pallas.1} parent=5 // pred_check_branch
      %144 = sbr.rel (%p141) target = $region12
    $region11: #{reg_pallas.1} parent=5 // pred_region
      %s145 = ssub.s32 %s9, 1
    $region12: #{reg_pallas.1} parent=5 // pred_fallthru
      _
    %p146 = scmp.lt.s32.totalorder %s9, 2
    // Predicated region
    $region13: #{reg_pallas.1} parent=5 // pred_check
      %p147 = pneg %p146
    $region14: #{reg_pallas.1} parent=5 // pred_check_branch
      %149 = sbr.rel (%p147) target = $region16
    $region15: #{reg_pallas.1} parent=5 // pred_region
      // Predicated region
      $region17: #{reg_pallas.1} parent=15 // pred_check
        %p150 = pneg %p43
      $region18: #{reg_pallas.1} parent=15 // pred_check_branch
        %152 = sbr.rel (%p150) target = $region20
      $region19: #{reg_pallas.1} parent=15 // pred_region
        %s153 = sadd.s32 %s16, %s17
        %p154 = scmp.lt.s32.totalorder %s153, 1
        %s155 = scalar_select %p154, %s153, 1
        %s156 = smul.addr %s155, 8
        %s157 = scalar_lea.vmem %s0, %s156
        %s158 = sadd.s32 %s16, %s17
      $region20: #{reg_pallas.1} parent=15 // pred_fallthru
        _
      // Predicated region
      $region21: #{reg_pallas.1} parent=15 // pred_check
        %p159 = pneg %p71
      $region22: #{reg_pallas.1} parent=15 // pred_check_branch
        %161 = sbr.rel (%p159) target = $region24
      $region23: #{reg_pallas.1} parent=15 // pred_region
        %s162 = sadd.s32 %s16, %s17
        %p163 = scmp.lt.s32.totalorder %s162, 1
        %s164 = scalar_select %p163, %s162, 1
        %s165 = smul.addr %s164, 8
        %s166 = scalar_lea.vmem %s1, %s165
        %s167 = sadd.s32 %s16, %s17
      $region24: #{reg_pallas.1} parent=15 // pred_fallthru
        _
      // Predicated region
      $region25: #{reg_pallas.1} parent=15 // pred_check
        %p168 = pneg %p99
      $region26: #{reg_pallas.1} parent=15 // pred_check_branch
        %170 = sbr.rel (%p168) target = $region28
      $region27: #{reg_pallas.1} parent=15 // pred_region
        %s171 = sadd.s32 %s16, %s17
        %p172 = scmp.lt.s32.totalorder %s171, 1
        %s173 = scalar_select %p172, %s171, 1
        %s174 = smul.addr %s173, 8
        %s175 = scalar_lea.vmem %s2, %s174
        %s176 = sadd.s32 %s16, %s17
      $region28: #{reg_pallas.1} parent=15 // pred_fallthru
        _
    $region16: #{reg_pallas.1} parent=5 // pred_fallthru
      _
    %p177 = scmp.le.s32.totalorder 1, %s9
    %p178 = scmp.lt.s32.totalorder %s9, 3
    %p179 = pnand %p177, %p178
    %p180 = pneg %p179
    // Predicated region
    $region29: #{reg_pallas.1} parent=5 // pred_check
      _
    $region30: #{reg_pallas.1} parent=5 // pred_check_branch
      %182 = sbr.rel (%p179) target = $region32
    $region31: #{reg_pallas.1} parent=5 // pred_region
      %s183 = ssub.s32 %s9, 1
      %s184 = sadd.s32 %s18, %s19
      %p185 = scmp.lt.s32.totalorder %s184, 1
      %s186 = scalar_select %p185, %s184, 1
      %s187 = smul.addr %s186, 8
      %s188 = scalar_lea.vmem %s0, %s187
      %p189 = pneg %p49
      %p190 = pneg %p46
      %s191 = sadd.s32 %s18, %s19
      %p192 = scmp.lt.s32.totalorder %s191, 1
      %s193 = scalar_select %p192, %s191, 1
      %s194 = smul.addr %s193, 8
      %s195 = scalar_lea.vmem %s1, %s194
      %p196 = pneg %p77
      %p197 = pneg %p74
      %s198 = sadd.s32 %s18, %s19
      %p199 = scmp.lt.s32.totalorder %s198, 1
      %s200 = scalar_select %p199, %s198, 1
      %s201 = smul.addr %s200, 8
      %s202 = scalar_lea.vmem %s2, %s201
      %p203 = pneg %p105
      %p204 = pneg %p102
      %p205 = pneg %p131
      %p206 = pneg %p128
      %s207 = smul.u32 8, %s18
      %p208 = scmp.lt.s32.totalorder %s207, 15
      %s209 = scalar_select %p208, %s207, 15
      %s210 = smul.addr %s209, 8
      %s211 = scalar_lea.vmem %s3, %s210
      %s212 = sadd.s32 %s18, %s19
      %p213 = scmp.lt.s32.totalorder %s212, 1
      %s214 = scalar_select %p213, %s212, 1
      %s215 = smul.addr %s214, 8
      %s216 = scalar_lea.vmem %s0, %s215
      %s217 = sadd.s32 %s18, %s19
      %s218 = sadd.s32 %s18, %s19
      %p219 = scmp.lt.s32.totalorder %s218, 1
      %s220 = scalar_select %p219, %s218, 1
      %s221 = smul.addr %s220, 8
      %s222 = scalar_lea.vmem %s1, %s221
      %s223 = sadd.s32 %s18, %s19
      %s224 = sadd.s32 %s18, %s19
      %p225 = scmp.lt.s32.totalorder %s224, 1
      %s226 = scalar_select %p225, %s224, 1
      %s227 = smul.addr %s226, 8
      %s228 = scalar_lea.vmem %s2, %s227
      %s229 = sadd.s32 %s18, %s19
      %s230 = smul.u32 8, %s18
      %p231 = scmp.lt.s32.totalorder %s230, 15
      %s232 = scalar_select %p231, %s230, 15
      %s233 = smul.addr %s232, 8
      %s234 = scalar_lea.vmem %s3, %s233
      %s235 = smul.u32 8, %s18
      %p236 = scmp.eq.s32.totalorder %s19, 0
      // Predicated region
      $region33: #{reg_pallas.1} parent=31 // pred_check
        %p237 = pneg %p236
      $region34: #{reg_pallas.1} parent=31 // pred_check_branch
        %239 = sbr.rel (%p237) target = $region36
      $region35: #{reg_pallas.1} parent=31 // pred_region
        %240 = vst [vmem:[%s234] sm:$0xff] 0.0
        %241 = vst [vmem:[%s234 + $0x8] sm:$0xff] 0.0
        %242 = vst [vmem:[%s234 + $0x10] sm:$0xff] 0.0
        %243 = vst [vmem:[%s234 + $0x18] sm:$0xff] 0.0
        %244 = vst [vmem:[%s234 + $0x20] sm:$0xff] 0.0
        %245 = vst [vmem:[%s234 + $0x28] sm:$0xff] 0.0
        %246 = vst [vmem:[%s234 + $0x30] sm:$0xff] 0.0
        %247 = vst [vmem:[%s234 + $0x38] sm:$0xff] 0.0
      $region36: #{reg_pallas.1} parent=31 // pred_fallthru
        _
      %v248 = vld [vmem:[%s216] sm:$0xff]
      %v249 = vld [vmem:[%s222] sm:$0xff]
      %v250 = vld [vmem:[%s228] sm:$0xff]
      %v251 = vld [vmem:[%s234] sm:$0xff]
      %v252 = vadd.f32 %v248, 0.0
      %v253 = vadd.f32 %v251, %v252
      %254 = vst [vmem:[%s234] sm:$0xff] %v253
      %s255 = scalar_lea.vmem %s234, 8
      %v256 = vld [vmem:[%s255] sm:$0xff]
      %v257 = vadd.f32 %v249, 0.0
      %v258 = vadd.f32 %v256, %v257
      %259 = vst [vmem:[%s255] sm:$0xff] %v258
      %s260 = scalar_lea.vmem %s234, 16
      %v261 = vld [vmem:[%s260] sm:$0xff]
      %v262 = vadd.f32 %v250, 0.0
      %v263 = vadd.f32 %v261, %v262
      %264 = vst [vmem:[%s260] sm:$0xff] %v263
      %s265 = scalar_lea.vmem %s234, 24
      %v266 = vld [vmem:[%s265] sm:$0xff]
      %v267 = vmul.f32 %v248, %v248
      %v268 = vadd.f32 %v267, 0.0
      %v269 = vadd.f32 %v266, %v268
      %270 = vst [vmem:[%s265] sm:$0xff] %v269
      %s271 = scalar_lea.vmem %s234, 32
      %v272 = vld [vmem:[%s271] sm:$0xff]
      %v273 = vmul.f32 %v249, %v249
      %v274 = vadd.f32 %v273, 0.0
      %v275 = vadd.f32 %v272, %v274
      %276 = vst [vmem:[%s271] sm:$0xff] %v275
      %s277 = scalar_lea.vmem %s234, 40
      %v278 = vld [vmem:[%s277] sm:$0xff]
      %v279 = vmul.f32 %v250, %v250
      %v280 = vadd.f32 %v279, 0.0
      %v281 = vadd.f32 %v278, %v280
      %282 = vst [vmem:[%s277] sm:$0xff] %v281
      %s283 = scalar_lea.vmem %s234, 48
      %v284 = vld [vmem:[%s283] sm:$0xff]
      %v285 = vmul.f32 %v248, %v250
      %v286 = vadd.f32 %v285, 0.0
      %v287 = vadd.f32 %v284, %v286
      %288 = vst [vmem:[%s283] sm:$0xff] %v287
      %s289 = scalar_lea.vmem %s234, 56
      %v290 = vld [vmem:[%s289] sm:$0xff]
      %v291 = vmul.f32 %v249, %v250
      %v292 = vadd.f32 %v291, 0.0
      %v293 = vadd.f32 %v290, %v292
      %294 = vst [vmem:[%s289] sm:$0xff] %v293
      %s295 = smul.u32 8, %s18
      %p296 = scmp.lt.s32.totalorder %s295, 15
      %s297 = scalar_select %p296, %s295, 15
      %s298 = smul.addr %s297, 8
      %s299 = scalar_lea.vmem %s3, %s298
      // Predicated region
      $region37: #{reg_pallas.1} parent=31 // pred_check
        %p300 = pneg %p128
      $region38: #{reg_pallas.1} parent=31 // pred_check_branch
        %302 = sbr.rel (%p300) target = $region40
      $region39: #{reg_pallas.1} parent=31 // pred_region
        %s303 = smul.u32 8, %s18
      $region40: #{reg_pallas.1} parent=31 // pred_fallthru
        _
    $region32: #{reg_pallas.1} parent=5 // pred_fallthru
      _
    %p304 = scmp.le.s32.totalorder 2, %s9
    // Predicated region
    $region41: #{reg_pallas.1} parent=5 // pred_check
      %p305 = pneg %p304
    $region42: #{reg_pallas.1} parent=5 // pred_check_branch
      %307 = sbr.rel (%p305) target = $region44
    $region43: #{reg_pallas.1} parent=5 // pred_region
      %s308 = ssub.s32 %s9, 2
      // Predicated region
      $region45: #{reg_pallas.1} parent=43 // pred_check
        %p309 = pneg %p134
      $region46: #{reg_pallas.1} parent=43 // pred_check_branch
        %311 = sbr.rel (%p309) target = $region48
      $region47: #{reg_pallas.1} parent=43 // pred_region
        %s312 = smul.u32 8, %s20
        %p313 = scmp.lt.s32.totalorder %s312, 15
        %s314 = scalar_select %p313, %s312, 15
        %s315 = smul.addr %s314, 8
        %s316 = scalar_lea.vmem %s3, %s315
      $region48: #{reg_pallas.1} parent=43 // pred_fallthru
        _
    $region44: #{reg_pallas.1} parent=5 // pred_fallthru
      _
  $region6: #{reg_pallas.1} parent=0 // loop_footer
    %s13 = sadd.s32 1, %s9
  $region7: #{reg_pallas.1} parent=0 // loop_footer_branch
    %8 = sbr.rel target = $region3
  $region8: #{reg_pallas.1} parent=0 // loop_exit
    _

</llo_original>
